<compile_context>
chip_gen: v5e
topology: v5e:2x2
jax: 0.10.0
libtpu: 0.0.40
codegen_flags: <defaults>
</compile_context>

<pallas_src>
import jax
import jax.numpy as jnp
from jax.experimental import pallas as pl
from jax.experimental.pallas import tpu as pltpu

MASK_LOSS = "__mask_loss"
MASK_ACCURACY = "__mask_accuracy"

# ---- synthetic model sizes (Framework.__init__ equivalents) ----
B = 4    # graphs per forward (batched to amortize launch overhead)
N = 64   # num_nodes per graph
T = 16   # num_tokens (vocab of graph_parser)
E = 32   # str embedding dim
D = 32   # hidden / feats dim  (head does feats @ emb.T, so D == E)

DEFAULT_CODE = 0
MASK_CODE = 1
MASK_PROB = 0.3


def _mask_model_kernel(ms_ref, lab_ref, msk_ref, fused_ref, emb_ref, b1_ref,
                       wout_ref, stats_ref, feats_ref):
    n = ms_ref.shape[1]
    t, _ = fused_ref.shape

    ms = ms_ref[0]                                   # (N, 1) int32 masked strings
    lab = lab_ref[0]                                 # (N, 1) int32 labels
    msk = msk_ref[0]                                 # (N, 1) f32 {0,1} mask

    # one-hots built in-kernel (VPU compare against a 2-D iota), no HBM traffic
    tok = jax.lax.broadcasted_iota(jnp.int32, (n, t), 1)          # (N, T)
    onehot = (tok == ms).astype(jnp.float32)                      # (N, T)
    label_oh = (tok == lab).astype(jnp.float32)                   # (N, T)

    # embedding lookup + first linear fused into a single MXU matmul:
    # fused = emb @ W1 precomputed outside (parameters only).
    feats = jnp.dot(onehot, fused_ref[...], preferred_element_type=jnp.float32)
    feats = jnp.maximum(feats + b1_ref[...], 0.0)                 # (N, D)
    feats_ref[0] = feats

    # head: feats against every token embedding; contract on dim 1 of both
    # operands so no explicit transpose of emb.
    logits = jax.lax.dot_general(
        feats, emb_ref[...],
        dimension_numbers=(((1,), (1,)), ((), ())),
        preferred_element_type=jnp.float32)                       # (N, T)

    # cross entropy (log-sum-exp + NLL), restricted to masked nodes
    row_max = jnp.max(logits, axis=-1, keepdims=True)
    lse = jnp.log(jnp.sum(jnp.exp(logits - row_max), axis=-1, keepdims=True)) + row_max
    label_logit = jnp.sum(label_oh * logits, axis=-1, keepdims=True)
    nll = lse - label_logit                                       # (N, 1)

    n_mask = jnp.sum(msk)
    inv = 1.0 / jnp.maximum(n_mask, 1.0)                          # guard: no-mask case
    loss = jnp.sum(nll * msk) * inv

    # accuracy with first-max argmax semantics (matches torch/jax argmax)
    idx_if_max = jnp.where(logits >= row_max, tok.astype(jnp.float32), float(t))
    arg = jnp.min(idx_if_max, axis=-1, keepdims=True)             # (N, 1) f32
    correct = (arg == lab.astype(jnp.float32)).astype(jnp.float32)
    acc = jnp.sum(correct * msk) * inv

    # readout (details.output): mean-pooled feats through a linear head
    pred = jnp.sum(jnp.dot(feats, wout_ref[...],
                           preferred_element_type=jnp.float32)) * (1.0 / n)

    # pack the per-graph scalars into one lane row -> single store / DMA
    lane = jax.lax.broadcasted_iota(jnp.int32, (1, 4), 1)
    stats = jnp.where(lane == 0, loss,
                      jnp.where(lane == 1, acc,
                                jnp.where(lane == 2, pred, n_mask)))
    stats_ref[0] = stats


def _run_kernel(masked, labels, mask, fused, emb, b1, wout):
    b_, n_, _ = masked.shape
    t_, d_ = fused.shape
    e_ = emb.shape[1]

    return pl.pallas_call(
        _mask_model_kernel,
        grid=(b_,),
        in_specs=[
            pl.BlockSpec((1, n_, 1), lambda b: (b, 0, 0)),   # masked strings
            pl.BlockSpec((1, n_, 1), lambda b: (b, 0, 0)),   # labels
            pl.BlockSpec((1, n_, 1), lambda b: (b, 0, 0)),   # mask
            pl.BlockSpec((t_, d_), lambda b: (0, 0)),        # fused emb @ W1
            pl.BlockSpec((t_, e_), lambda b: (0, 0)),        # emb (head weights)
            pl.BlockSpec((1, d_), lambda b: (0, 0)),         # b1
            pl.BlockSpec((d_, 1), lambda b: (0, 0)),         # wout
        ],
        out_specs=(
            pl.BlockSpec((1, 1, 4), lambda b: (b, 0, 0)),    # [loss, acc, pred, n_mask]
            pl.BlockSpec((1, n_, d_), lambda b: (b, 0, 0)),  # feats
        ),
        out_shape=(
            jax.ShapeDtypeStruct((b_, 1, 4), jnp.float32),
            jax.ShapeDtypeStruct((b_, n_, d_), jnp.float32),
        ),
        compiler_params=pltpu.CompilerParams(
            dimension_semantics=("parallel",)),
    )(masked, labels, mask, fused, emb, b1, wout)


def _make_mask(strings, rng_key, mask_prob):
    """Same semantics as Model.mask_forward's mask selection (glue, not hot path)."""
    rand = jax.random.uniform(rng_key, strings.shape)
    mask = (strings != DEFAULT_CODE) & (rand < mask_prob)
    masked = jnp.where(mask, MASK_CODE, strings).astype(jnp.int32)
    return mask, masked


class PallasModel:
    """JAX/Pallas analogue of all2graph Model (masked-LM forward path)."""

    def __init__(self, params, mask_prob=MASK_PROB, mask_loss_weight=1.0,
                 return_details=False, return_embedding=False):
        self.params = params
        self.mask_prob = mask_prob
        self.mask_loss_weight = mask_loss_weight
        self.return_details = return_details
        self.return_embedding = return_embedding
        # parameters-only product: fold embedding lookup + first linear into
        # one table so the kernel does a single MXU matmul for feats.
        self._fused = jnp.dot(params["emb"], params["w1"],
                              preferred_element_type=jnp.float32)   # (T, D)

    def forward(self, strings, rng_key):
        emb, b1, wout = self.params["emb"], self.params["b1"], self.params["wout"]

        single = strings.ndim == 1
        if single:
            strings = strings[None]                              # (1, N)
        strings = strings.astype(jnp.int32)

        mask, masked = _make_mask(strings, rng_key, self.mask_prob)

        stats, feats = _run_kernel(
            masked[..., None],                                   # (B, N, 1) int32
            strings[..., None],                                  # (B, N, 1) int32
            mask.astype(jnp.float32)[..., None],                 # (B, N, 1) f32
            self._fused, emb, b1, wout)

        loss = stats[:, 0, 0]
        acc = stats[:, 0, 1]
        pred = stats[:, 0, 2]
        if single:
            loss, acc, pred, feats = loss[0], acc[0], pred[0], feats[0]

        output = {
            "pred": pred,
            MASK_LOSS: loss * 1.0,     # MaskLossWrapper applies mask_loss_weight at loss time
            MASK_ACCURACY: acc,
        }
        details = {"output": output, "feats": feats,
                   "readout_feats": feats.mean(axis=-2)}
        if self.return_details:
            return details
        if self.return_embedding:
            return details["readout_feats"]
        return details["output"]
    # TODO(synk): fit / build_model / predict are host-side training plumbing
    # (DataLoader, Trainer, CSV parsing) with no device compute to port.


def _init_params(key):
    k1, k2, k3, k4 = jax.random.split(key, 4)
    return {
        "emb": jax.random.normal(k1, (T, E), jnp.float32) * 0.1,
        "w1": jax.random.normal(k2, (E, D), jnp.float32) * 0.1,
        "b1": jax.random.normal(k3, (1, D), jnp.float32) * 0.01,
        "wout": jax.random.normal(k4, (D, 1), jnp.float32) * 0.1,
    }


def _reference(params, strings, rng_key, mask_prob):
    """Pure-JAX reference for correctness check (batched over graphs)."""
    emb, w1, b1, wout = params["emb"], params["w1"], params["b1"], params["wout"]
    mask, masked = _make_mask(strings, rng_key, mask_prob)
    h = emb[masked]                                              # (B, N, E)
    feats = jnp.maximum(h @ w1 + b1, 0.0)                        # (B, N, D)
    logits = feats @ emb.T                                       # (B, N, T)
    logp = jax.nn.log_softmax(logits, axis=-1)
    nll = -jnp.take_along_axis(logp, strings[..., None], axis=-1)[..., 0]
    m = mask.astype(jnp.float32)
    denom = jnp.maximum(m.sum(-1), 1.0)
    loss = (nll * m).sum(-1) / denom
    acc = ((jnp.argmax(logits, axis=-1) == strings).astype(jnp.float32) * m).sum(-1) / denom
    pred = feats.mean(axis=1) @ wout[:, 0]
    return loss, acc, pred


if __name__ == "__main__":
    key = jax.random.PRNGKey(0)
    k_params, k_strings, k_mask = jax.random.split(key, 3)

    params = _init_params(k_params)
    strings = jax.random.randint(k_strings, (B, N), 0, T, dtype=jnp.int32)

    model = PallasModel(params, mask_prob=MASK_PROB)
    output = model.forward(strings, k_mask)
    jax.block_until_ready(output)

    ref_loss, ref_acc, ref_pred = _reference(params, strings, k_mask, MASK_PROB)
    assert jnp.allclose(output[MASK_LOSS], ref_loss, rtol=1e-5, atol=1e-5)
    assert jnp.allclose(output[MASK_ACCURACY], ref_acc, rtol=1e-5, atol=1e-5)
    assert jnp.allclose(output["pred"], ref_pred, rtol=1e-5, atol=1e-5)

    print("KERNEL_OK")
</pallas_src>

<mosaic_0001>
module attributes {stable_mosaic.version = 11 : i64} {
  func.func @_mask_model_kernel(%arg0: i32, %arg1: memref<1x64x1xi32, #tpu.memory_space<vmem>>, %arg2: memref<1x64x1xi32, #tpu.memory_space<vmem>>, %arg3: memref<1x64x1xf32, #tpu.memory_space<vmem>>, %arg4: memref<16x32xf32, #tpu.memory_space<vmem>>, %arg5: memref<16x32xf32, #tpu.memory_space<vmem>>, %arg6: memref<1x32xf32, #tpu.memory_space<vmem>>, %arg7: memref<32x1xf32, #tpu.memory_space<vmem>>, %arg8: memref<1x1x4xf32, #tpu.memory_space<vmem>>, %arg9: memref<1x64x32xf32, #tpu.memory_space<vmem>>) attributes {dimension_semantics = [#tpu.dimension_semantics<parallel>], iteration_bounds = array<i64: 4>, scalar_prefetch = 0 : i64, scratch_operands = 0 : i64, tpu.core_type = #tpu.core_type<tc>, window_params = [{transform_indices = @transform_0, window_bounds = array<i64: 1, 64, 1>}, {transform_indices = @transform_1, window_bounds = array<i64: 1, 64, 1>}, {transform_indices = @transform_2, window_bounds = array<i64: 1, 64, 1>}, {pipeline_mode = #tpu.pipeline_mode<synchronous>, transform_indices = @transform_3, window_bounds = array<i64: 16, 32>}, {pipeline_mode = #tpu.pipeline_mode<synchronous>, transform_indices = @transform_4, window_bounds = array<i64: 16, 32>}, {pipeline_mode = #tpu.pipeline_mode<synchronous>, transform_indices = @transform_5, window_bounds = array<i64: 1, 32>}, {pipeline_mode = #tpu.pipeline_mode<synchronous>, transform_indices = @transform_6, window_bounds = array<i64: 32, 1>}, {transform_indices = @transform_7, window_bounds = array<i64: 1, 1, 4>}, {transform_indices = @transform_8, window_bounds = array<i64: 1, 64, 32>}]} {
    %c0 = arith.constant 0 : index
    %c0_0 = arith.constant 0 : index
    %c0_1 = arith.constant 0 : index
    %0 = vector.load %arg1[%c0, %c0_0, %c0_1] : memref<1x64x1xi32, #tpu.memory_space<vmem>>, vector<1x64x1xi32>
    %1 = vector.shape_cast %0 : vector<1x64x1xi32> to vector<64x1xi32>
    %c0_2 = arith.constant 0 : index
    %c0_3 = arith.constant 0 : index
    %c0_4 = arith.constant 0 : index
    %2 = vector.load %arg2[%c0_2, %c0_3, %c0_4] : memref<1x64x1xi32, #tpu.memory_space<vmem>>, vector<1x64x1xi32>
    %3 = vector.shape_cast %2 : vector<1x64x1xi32> to vector<64x1xi32>
    %c0_5 = arith.constant 0 : index
    %c0_6 = arith.constant 0 : index
    %c0_7 = arith.constant 0 : index
    %4 = vector.load %arg3[%c0_5, %c0_6, %c0_7] : memref<1x64x1xf32, #tpu.memory_space<vmem>>, vector<1x64x1xf32>
    %5 = vector.shape_cast %4 : vector<1x64x1xf32> to vector<64x1xf32>
    %6 = tpu.iota {dimensions = array<i32: 1>} : vector<64x16xi32>
    %7 = vector.broadcast %1 : vector<64x1xi32> to vector<64x16xi32>
    %8 = arith.cmpi eq, %6, %7 : vector<64x16xi32>
    %9 = arith.extui %8 : vector<64x16xi1> to vector<64x16xi32>
    %10 = arith.sitofp %9 : vector<64x16xi32> to vector<64x16xf32>
    %11 = vector.broadcast %3 : vector<64x1xi32> to vector<64x16xi32>
    %12 = arith.cmpi eq, %6, %11 : vector<64x16xi32>
    %13 = arith.extui %12 : vector<64x16xi1> to vector<64x16xi32>
    %14 = arith.sitofp %13 : vector<64x16xi32> to vector<64x16xf32>
    %c0_8 = arith.constant 0 : index
    %c0_9 = arith.constant 0 : index
    %15 = vector.load %arg4[%c0_8, %c0_9] : memref<16x32xf32, #tpu.memory_space<vmem>>, vector<16x32xf32>
    %cst = arith.constant dense<0.000000e+00> : vector<64x32xf32>
    %16 = tpu.matmul %10, %15, %cst {dimension_numbers = #tpu.dot_dimension_numbers<[1], [0], [0], [1], [0, 0, 1, 1], [], []>} : vector<64x16xf32>, vector<16x32xf32>, vector<64x32xf32> -> vector<64x32xf32>
    %c0_10 = arith.constant 0 : index
    %c0_11 = arith.constant 0 : index
    %17 = vector.load %arg6[%c0_10, %c0_11] : memref<1x32xf32, #tpu.memory_space<vmem>>, vector<1x32xf32>
    %18 = vector.broadcast %17 : vector<1x32xf32> to vector<64x32xf32>
    %19 = arith.addf %16, %18 : vector<64x32xf32>
    %cst_12 = arith.constant 0.000000e+00 : f32
    %20 = vector.broadcast %cst_12 : f32 to vector<64x32xf32>
    %21 = arith.maximumf %19, %20 : vector<64x32xf32>
    %c0_13 = arith.constant 0 : index
    %c0_14 = arith.constant 0 : index
    %c0_15 = arith.constant 0 : index
    %22 = vector.load %arg9[%c0_13, %c0_14, %c0_15] : memref<1x64x32xf32, #tpu.memory_space<vmem>>, vector<1x64x32xf32>
    %23 = vector.shape_cast %22 : vector<1x64x32xf32> to vector<64x32xf32>
    %24 = vector.shape_cast %21 : vector<64x32xf32> to vector<1x64x32xf32>
    tpu.vector_store %arg9[%c0_13, %c0_14, %c0_15], %24 {strides = array<i32>} : memref<1x64x32xf32, #tpu.memory_space<vmem>>, vector<1x64x32xf32>,
    %c0_16 = arith.constant 0 : index
    %c0_17 = arith.constant 0 : index
    %25 = vector.load %arg5[%c0_16, %c0_17] : memref<16x32xf32, #tpu.memory_space<vmem>>, vector<16x32xf32>
    %cst_18 = arith.constant dense<0.000000e+00> : vector<64x16xf32>
    %26 = tpu.matmul %21, %25, %cst_18 {dimension_numbers = #tpu.dot_dimension_numbers<[1], [1], [0], [0], [0, 0, 1, 0], [], []>} : vector<64x32xf32>, vector<16x32xf32>, vector<64x16xf32> -> vector<64x16xf32>
    %cst_19 = arith.constant dense<0xFF800000> : vector<64xf32>
    %27 = vector.multi_reduction <maximumf>, %26, %cst_19 [1] : vector<64x16xf32> to vector<64xf32>
    %28 = vector.shape_cast %27 : vector<64xf32> to vector<64x1xf32>
    %29 = vector.broadcast %28 : vector<64x1xf32> to vector<64x16xf32>
    %30 = arith.subf %26, %29 : vector<64x16xf32>
    %31 = math.exp %30 : vector<64x16xf32>
    %cst_20 = arith.constant dense<0.000000e+00> : vector<64xf32>
    %32 = vector.multi_reduction <add>, %31, %cst_20 [1] : vector<64x16xf32> to vector<64xf32>
    %33 = vector.shape_cast %32 : vector<64xf32> to vector<64x1xf32>
    %34 = math.log %33 : vector<64x1xf32>
    %35 = arith.addf %34, %28 : vector<64x1xf32>
    %36 = arith.mulf %14, %26 : vector<64x16xf32>
    %cst_21 = arith.constant dense<0.000000e+00> : vector<64xf32>
    %37 = vector.multi_reduction <add>, %36, %cst_21 [1] : vector<64x16xf32> to vector<64xf32>
    %38 = vector.shape_cast %37 : vector<64xf32> to vector<64x1xf32>
    %39 = arith.subf %35, %38 : vector<64x1xf32>
    %40 = vector.shape_cast %5 : vector<64x1xf32> to vector<1x64x1xf32>
    %cst_22 = arith.constant dense<0.000000e+00> : vector<1xf32>
    %41 = vector.multi_reduction <add>, %40, %cst_22 [1, 2] : vector<1x64x1xf32> to vector<1xf32>
    %42 = vector.shape_cast %41 : vector<1xf32> to vector<1x1x1xf32>
    %43 = vector.extract %42[0, 0, 0] : f32 from vector<1x1x1xf32>
    %cst_23 = arith.constant 1.000000e+00 : f32
    %44 = arith.maximumf %43, %cst_23 : f32
    %cst_24 = arith.constant 1.000000e+00 : f32
    %45 = arith.divf %cst_24, %44 : f32
    %46 = arith.mulf %39, %5 : vector<64x1xf32>
    %47 = vector.shape_cast %46 : vector<64x1xf32> to vector<1x64x1xf32>
    %cst_25 = arith.constant dense<0.000000e+00> : vector<1xf32>
    %48 = vector.multi_reduction <add>, %47, %cst_25 [1, 2] : vector<1x64x1xf32> to vector<1xf32>
    %49 = vector.shape_cast %48 : vector<1xf32> to vector<1x1x1xf32>
    %50 = vector.extract %49[0, 0, 0] : f32 from vector<1x1x1xf32>
    %51 = arith.mulf %50, %45 : f32
    %52 = vector.broadcast %28 : vector<64x1xf32> to vector<64x16xf32>
    %53 = arith.cmpf oge, %26, %52 : vector<64x16xf32>
    %54 = arith.sitofp %6 : vector<64x16xi32> to vector<64x16xf32>
    %cst_26 = arith.constant 1.600000e+01 : f32
    %55 = vector.broadcast %cst_26 : f32 to vector<64x16xf32>
    %56 = arith.select %53, %54, %55 : vector<64x16xi1>, vector<64x16xf32>
    %cst_27 = arith.constant dense<0x7F800000> : vector<64xf32>
    %57 = vector.multi_reduction <minimumf>, %56, %cst_27 [1] : vector<64x16xf32> to vector<64xf32>
    %58 = vector.shape_cast %57 : vector<64xf32> to vector<64x1xf32>
    %59 = arith.sitofp %3 : vector<64x1xi32> to vector<64x1xf32>
    %60 = arith.cmpf oeq, %58, %59 : vector<64x1xf32>
    %61 = arith.extui %60 : vector<64x1xi1> to vector<64x1xi32>
    %62 = arith.sitofp %61 : vector<64x1xi32> to vector<64x1xf32>
    %63 = arith.mulf %62, %5 : vector<64x1xf32>
    %64 = vector.shape_cast %63 : vector<64x1xf32> to vector<1x64x1xf32>
    %cst_28 = arith.constant dense<0.000000e+00> : vector<1xf32>
    %65 = vector.multi_reduction <add>, %64, %cst_28 [1, 2] : vector<1x64x1xf32> to vector<1xf32>
    %66 = vector.shape_cast %65 : vector<1xf32> to vector<1x1x1xf32>
    %67 = vector.extract %66[0, 0, 0] : f32 from vector<1x1x1xf32>
    %68 = arith.mulf %67, %45 : f32
    %c0_29 = arith.constant 0 : index
    %c0_30 = arith.constant 0 : index
    %69 = vector.load %arg7[%c0_29, %c0_30] : memref<32x1xf32, #tpu.memory_space<vmem>>, vector<32x1xf32>
    %cst_31 = arith.constant dense<0.000000e+00> : vector<64x1xf32>
    %70 = tpu.matmul %21, %69, %cst_31 {dimension_numbers = #tpu.dot_dimension_numbers<[1], [0], [0], [1], [0, 0, 1, 1], [], []>} : vector<64x32xf32>, vector<32x1xf32>, vector<64x1xf32> -> vector<64x1xf32>
    %71 = vector.shape_cast %70 : vector<64x1xf32> to vector<1x64x1xf32>
    %cst_32 = arith.constant dense<0.000000e+00> : vector<1xf32>
    %72 = vector.multi_reduction <add>, %71, %cst_32 [1, 2] : vector<1x64x1xf32> to vector<1xf32>
    %73 = vector.shape_cast %72 : vector<1xf32> to vector<1x1x1xf32>
    %74 = vector.extract %73[0, 0, 0] : f32 from vector<1x1x1xf32>
    %cst_33 = arith.constant 1.562500e-02 : f32
    %75 = arith.mulf %74, %cst_33 : f32
    %76 = tpu.iota {dimensions = array<i32: 1>} : vector<1x4xi32>
    %c0_i32 = arith.constant 0 : i32
    %77 = vector.broadcast %c0_i32 : i32 to vector<1x4xi32>
    %78 = arith.cmpi eq, %76, %77 : vector<1x4xi32>
    %c1_i32 = arith.constant 1 : i32
    %79 = vector.broadcast %c1_i32 : i32 to vector<1x4xi32>
    %80 = arith.cmpi eq, %76, %79 : vector<1x4xi32>
    %c2_i32 = arith.constant 2 : i32
    %81 = vector.broadcast %c2_i32 : i32 to vector<1x4xi32>
    %82 = arith.cmpi eq, %76, %81 : vector<1x4xi32>
    %83 = vector.broadcast %75 : f32 to vector<1x4xf32>
    %84 = vector.broadcast %43 : f32 to vector<1x4xf32>
    %85 = arith.select %82, %83, %84 : vector<1x4xi1>, vector<1x4xf32>
    %86 = vector.broadcast %68 : f32 to vector<1x4xf32>
    %87 = arith.select %80, %86, %85 : vector<1x4xi1>, vector<1x4xf32>
    %88 = vector.broadcast %51 : f32 to vector<1x4xf32>
    %89 = arith.select %78, %88, %87 : vector<1x4xi1>, vector<1x4xf32>
    %c0_34 = arith.constant 0 : index
    %c0_35 = arith.constant 0 : index
    %c0_36 = arith.constant 0 : index
    %90 = vector.load %arg8[%c0_34, %c0_35, %c0_36] : memref<1x1x4xf32, #tpu.memory_space<vmem>>, vector<1x1x4xf32>
    %91 = vector.shape_cast %90 : vector<1x1x4xf32> to vector<1x4xf32>
    %92 = vector.shape_cast %89 : vector<1x4xf32> to vector<1x1x4xf32>
    tpu.vector_store %arg8[%c0_34, %c0_35, %c0_36], %92 {strides = array<i32>} : memref<1x1x4xf32, #tpu.memory_space<vmem>>, vector<1x1x4xf32>,
    return
  }
  func.func @transform_0(%arg0: i32) -> (i32, i32, i32) {
    %c0_i32 = arith.constant 0 : i32
    %c0_i32_0 = arith.constant 0 : i32
    %c0_i32_1 = arith.constant 0 : i32
    return %arg0, %c0_i32, %c0_i32_0 : i32, i32, i32
  }
  func.func @transform_1(%arg0: i32) -> (i32, i32, i32) {
    %c0_i32 = arith.constant 0 : i32
    %c0_i32_0 = arith.constant 0 : i32
    %c0_i32_1 = arith.constant 0 : i32
    return %arg0, %c0_i32, %c0_i32_0 : i32, i32, i32
  }
  func.func @transform_2(%arg0: i32) -> (i32, i32, i32) {
    %c0_i32 = arith.constant 0 : i32
    %c0_i32_0 = arith.constant 0 : i32
    %c0_i32_1 = arith.constant 0 : i32
    return %arg0, %c0_i32, %c0_i32_0 : i32, i32, i32
  }
  func.func @transform_3(%arg0: i32) -> (i32, i32) {
    %c0_i32 = arith.constant 0 : i32
    %c0_i32_0 = arith.constant 0 : i32
    %c0_i32_1 = arith.constant 0 : i32
    return %c0_i32, %c0_i32_0 : i32, i32
  }
  func.func @transform_4(%arg0: i32) -> (i32, i32) {
    %c0_i32 = arith.constant 0 : i32
    %c0_i32_0 = arith.constant 0 : i32
    %c0_i32_1 = arith.constant 0 : i32
    return %c0_i32, %c0_i32_0 : i32, i32
  }
  func.func @transform_5(%arg0: i32) -> (i32, i32) {
    %c0_i32 = arith.constant 0 : i32
    %c0_i32_0 = arith.constant 0 : i32
    %c0_i32_1 = arith.constant 0 : i32
    return %c0_i32, %c0_i32_0 : i32, i32
  }
  func.func @transform_6(%arg0: i32) -> (i32, i32) {
    %c0_i32 = arith.constant 0 : i32
    %c0_i32_0 = arith.constant 0 : i32
    %c0_i32_1 = arith.constant 0 : i32
    return %c0_i32, %c0_i32_0 : i32, i32
  }
  func.func @transform_7(%arg0: i32) -> (i32, i32, i32) {
    %c0_i32 = arith.constant 0 : i32
    %c0_i32_0 = arith.constant 0 : i32
    %c0_i32_1 = arith.constant 0 : i32
    return %arg0, %c0_i32, %c0_i32_0 : i32, i32, i32
  }
  func.func @transform_8(%arg0: i32) -> (i32, i32, i32) {
    %c0_i32 = arith.constant 0 : i32
    %c0_i32_0 = arith.constant 0 : i32
    %c0_i32_1 = arith.constant 0 : i32
    return %arg0, %c0_i32, %c0_i32_0 : i32, i32, i32
  }
}

</mosaic_0001>

<llo_original>
// kernel: tpu_custom_call.1
$region0: #{tpu_custom_call.1}
  #allocation0 [shape = 'u32[]', space=smem, size = 0x4, offset = 0x4, fixed_abs, tag = 'smem constant byte address 0x4 - core index']
  #allocation1 [shape = 'u32[72,128]{1,0:T(1,128)}', space=vmem, size = 0x9000, scoped, tag = 'internal scratch']
  %s0 = inlined_call_operand.vmem [shape: s32[4,64,1], index: 0, kind: input, shape index: {}]
  %s1 = inlined_call_operand.vmem [shape: s32[4,64,1], index: 1, kind: input, shape index: {}]
  %s2 = inlined_call_operand.vmem [shape: f32[4,64,1], index: 2, kind: input, shape index: {}]
  %s3 = inlined_call_operand.vmem [shape: f32[16,32], index: 3, kind: input, shape index: {}]
  %s4 = inlined_call_operand.vmem [shape: f32[16,32], index: 4, kind: input, shape index: {}]
  %s5 = inlined_call_operand.vmem [shape: f32[1,32], index: 5, kind: input, shape index: {}]
  %s6 = inlined_call_operand.vmem [shape: f32[32,1], index: 6, kind: input, shape index: {}]
  %s7 = inlined_call_operand.hbm [shape: f32[4,1,4], index: 7, kind: output, shape index: {0}]
  %s8 = inlined_call_operand.vmem [shape: f32[4,64,32], index: 8, kind: output, shape index: {1}]
  %9 = xla_tuple %s7, %s8
  %s10 = sld [smem:[#allocation0]]
  $region69: #{tpu_custom_call.1} parent=0
    _
  %s12 = ssub.s32 1, %s10
  %s13 = scalar_select 0, %s12, %s10
  $region1: #{tpu_custom_call.1} parent=0
    #allocation2 [shape = 'u8[1024]{0}', space=vmem, size = 0x400, scoped, tag = 'output window, operand 0']
    #allocation3 [shape = 's32[2]{0}', space=sflag, size = 0x8, scoped, tag = 'scoped memory for tpu_custom_call.1']
    %14 = vsyncpa [#allocation3], 0
    %s15 = scalar_lea.sflag [#allocation3], 1
    %16 = vsyncpa %s15, 0
    loop: start=0, step=1, limit=6
    $region2: #{tpu_custom_call.1} parent=1 // loop_pre_header
      _
    $region3: #{tpu_custom_call.1} parent=1 // loop_header
      %s18 = sphi 0, %s22
      %p19 = scmp.ge.s32.totalorder %s18, 6
      %s28 = sphi 0, %s30
      %s31 = sphi 0, %s28
      %s32 = sphi 0, %s31
      %s48 = sphi 0, %s32
      %s54 = sphi 0, %s56
      %s57 = sphi 0, %s54
      %s58 = sphi 0, %s57
      %s74 = sphi 0, %s58
      %s80 = sphi 0, %s82
      %s83 = sphi 0, %s80
      %s84 = sphi 0, %s83
      %s100 = sphi 0, %s84
      %s104 = sphi 0, %s104
      %s106 = sphi 0, %s104
      %s107 = sphi 0, %s106
      %s121 = sphi 0, %s107
      %s125 = sphi 0, %s125
      %s127 = sphi 0, %s125
      %s128 = sphi 0, %s127
      %s142 = sphi 0, %s128
      %s146 = sphi 0, %s146
      %s148 = sphi 0, %s146
      %s149 = sphi 0, %s148
      %s163 = sphi 0, %s149
      %s167 = sphi 0, %s167
      %s169 = sphi 0, %s167
      %s170 = sphi 0, %s169
      %s184 = sphi 0, %s170
      %s190 = sphi 0, %s192
      %s193 = sphi 0, %s190
      %s194 = sphi 0, %s193
      %s210 = sphi 0, %s194
      %s216 = sphi 0, %s218
      %s219 = sphi 0, %s216
      %s220 = sphi 0, %s219
      %s236 = sphi 0, %s220
    $region4: #{tpu_custom_call.1} parent=1 // loop_header_branch
      %21 = sbr.rel (%p19) target = $region8
    $region5: #{tpu_custom_call.1} parent=1 // loop_body
      %s23 = ssub.s32 %s18, 1
      %s24 = ssub.s32 %s18, 2
      %s25 = sadd.s32 %s18, 1
      %s26 = ssub.s32 %s18, %s25
      %p27 = scmp.eq.s32.totalorder %s26, 0
      %s29 = sadd.s32 %s28, 1
      %s30 = scalar_select %p27, %s28, %s29
      %p33 = pneg %p27
      %p34 = scmp.eq.s32.totalorder %s18, 3
      %p35 = por %p33, %p34
      %p36 = scmp.ne.s32.totalorder %s28, %s31
      %p37 = scmp.eq.s32.totalorder %s18, 0
      %p38 = por %p36, %p37
      %p39 = scmp.ne.s32.totalorder %s28, %s31
      %p40 = scmp.eq.s32.totalorder %s23, 3
      %p41 = por %p39, %p40
      %p42 = scmp.ne.s32.totalorder %s31, %s32
      %p43 = scmp.eq.s32.totalorder %s23, 0
      %p44 = por %p42, %p43
      %p45 = scmp.ne.s32.totalorder %s31, %s32
      %p46 = scmp.eq.s32.totalorder %s24, 3
      %p47 = por %p45, %p46
      %p49 = scmp.ne.s32.totalorder %s32, %s48
      %p50 = scmp.eq.s32.totalorder %s24, 0
      %p51 = por %p49, %p50
      %s52 = ssub.s32 %s18, %s25
      %p53 = scmp.eq.s32.totalorder %s52, 0
      %s55 = sadd.s32 %s54, 1
      %s56 = scalar_select %p53, %s54, %s55
      %p59 = pneg %p53
      %p60 = scmp.eq.s32.totalorder %s18, 3
      %p61 = por %p59, %p60
      %p62 = scmp.ne.s32.totalorder %s54, %s57
      %p63 = scmp.eq.s32.totalorder %s18, 0
      %p64 = por %p62, %p63
      %p65 = scmp.ne.s32.totalorder %s54, %s57
      %p66 = scmp.eq.s32.totalorder %s23, 3
      %p67 = por %p65, %p66
      %p68 = scmp.ne.s32.totalorder %s57, %s58
      %p69 = scmp.eq.s32.totalorder %s23, 0
      %p70 = por %p68, %p69
      %p71 = scmp.ne.s32.totalorder %s57, %s58
      %p72 = scmp.eq.s32.totalorder %s24, 3
      %p73 = por %p71, %p72
      %p75 = scmp.ne.s32.totalorder %s58, %s74
      %p76 = scmp.eq.s32.totalorder %s24, 0
      %p77 = por %p75, %p76
      %s78 = ssub.s32 %s18, %s25
      %p79 = scmp.eq.s32.totalorder %s78, 0
      %s81 = sadd.s32 %s80, 1
      %s82 = scalar_select %p79, %s80, %s81
      %p85 = pneg %p79
      %p86 = scmp.eq.s32.totalorder %s18, 3
      %p87 = por %p85, %p86
      %p88 = scmp.ne.s32.totalorder %s80, %s83
      %p89 = scmp.eq.s32.totalorder %s18, 0
      %p90 = por %p88, %p89
      %p91 = scmp.ne.s32.totalorder %s80, %s83
      %p92 = scmp.eq.s32.totalorder %s23, 3
      %p93 = por %p91, %p92
      %p94 = scmp.ne.s32.totalorder %s83, %s84
      %p95 = scmp.eq.s32.totalorder %s23, 0
      %p96 = por %p94, %p95
      %p97 = scmp.ne.s32.totalorder %s83, %s84
      %p98 = scmp.eq.s32.totalorder %s24, 3
      %p99 = por %p97, %p98
      %p101 = scmp.ne.s32.totalorder %s84, %s100
      %p102 = scmp.eq.s32.totalorder %s24, 0
      %p103 = por %p101, %p102
      %s105 = sadd.s32 %s104, 1
      %p108 = scmp.eq.s32.totalorder %s18, 3
      %p109 = scmp.ne.s32.totalorder %s104, %s106
      %p110 = scmp.eq.s32.totalorder %s18, 0
      %p111 = por %p109, %p110
      %p112 = scmp.ne.s32.totalorder %s104, %s106
      %p113 = scmp.eq.s32.totalorder %s23, 3
      %p114 = por %p112, %p113
      %p115 = scmp.ne.s32.totalorder %s106, %s107
      %p116 = scmp.eq.s32.totalorder %s23, 0
      %p117 = por %p115, %p116
      %p118 = scmp.ne.s32.totalorder %s106, %s107
      %p119 = scmp.eq.s32.totalorder %s24, 3
      %p120 = por %p118, %p119
      %p122 = scmp.ne.s32.totalorder %s107, %s121
      %p123 = scmp.eq.s32.totalorder %s24, 0
      %p124 = por %p122, %p123
      %s126 = sadd.s32 %s125, 1
      %p129 = scmp.eq.s32.totalorder %s18, 3
      %p130 = scmp.ne.s32.totalorder %s125, %s127
      %p131 = scmp.eq.s32.totalorder %s18, 0
      %p132 = por %p130, %p131
      %p133 = scmp.ne.s32.totalorder %s125, %s127
      %p134 = scmp.eq.s32.totalorder %s23, 3
      %p135 = por %p133, %p134
      %p136 = scmp.ne.s32.totalorder %s127, %s128
      %p137 = scmp.eq.s32.totalorder %s23, 0
      %p138 = por %p136, %p137
      %p139 = scmp.ne.s32.totalorder %s127, %s128
      %p140 = scmp.eq.s32.totalorder %s24, 3
      %p141 = por %p139, %p140
      %p143 = scmp.ne.s32.totalorder %s128, %s142
      %p144 = scmp.eq.s32.totalorder %s24, 0
      %p145 = por %p143, %p144
      %s147 = sadd.s32 %s146, 1
      %p150 = scmp.eq.s32.totalorder %s18, 3
      %p151 = scmp.ne.s32.totalorder %s146, %s148
      %p152 = scmp.eq.s32.totalorder %s18, 0
      %p153 = por %p151, %p152
      %p154 = scmp.ne.s32.totalorder %s146, %s148
      %p155 = scmp.eq.s32.totalorder %s23, 3
      %p156 = por %p154, %p155
      %p157 = scmp.ne.s32.totalorder %s148, %s149
      %p158 = scmp.eq.s32.totalorder %s23, 0
      %p159 = por %p157, %p158
      %p160 = scmp.ne.s32.totalorder %s148, %s149
      %p161 = scmp.eq.s32.totalorder %s24, 3
      %p162 = por %p160, %p161
      %p164 = scmp.ne.s32.totalorder %s149, %s163
      %p165 = scmp.eq.s32.totalorder %s24, 0
      %p166 = por %p164, %p165
      %s168 = sadd.s32 %s167, 1
      %p171 = scmp.eq.s32.totalorder %s18, 3
      %p172 = scmp.ne.s32.totalorder %s167, %s169
      %p173 = scmp.eq.s32.totalorder %s18, 0
      %p174 = por %p172, %p173
      %p175 = scmp.ne.s32.totalorder %s167, %s169
      %p176 = scmp.eq.s32.totalorder %s23, 3
      %p177 = por %p175, %p176
      %p178 = scmp.ne.s32.totalorder %s169, %s170
      %p179 = scmp.eq.s32.totalorder %s23, 0
      %p180 = por %p178, %p179
      %p181 = scmp.ne.s32.totalorder %s169, %s170
      %p182 = scmp.eq.s32.totalorder %s24, 3
      %p183 = por %p181, %p182
      %p185 = scmp.ne.s32.totalorder %s170, %s184
      %p186 = scmp.eq.s32.totalorder %s24, 0
      %p187 = por %p185, %p186
      %s188 = ssub.s32 %s18, %s25
      %p189 = scmp.eq.s32.totalorder %s188, 0
      %s191 = sadd.s32 %s190, 1
      %s192 = scalar_select %p189, %s190, %s191
      %p195 = pneg %p189
      %p196 = scmp.eq.s32.totalorder %s18, 3
      %p197 = por %p195, %p196
      %p198 = scmp.ne.s32.totalorder %s190, %s193
      %p199 = scmp.eq.s32.totalorder %s18, 0
      %p200 = por %p198, %p199
      %p201 = scmp.ne.s32.totalorder %s190, %s193
      %p202 = scmp.eq.s32.totalorder %s23, 3
      %p203 = por %p201, %p202
      %p204 = scmp.ne.s32.totalorder %s193, %s194
      %p205 = scmp.eq.s32.totalorder %s23, 0
      %p206 = por %p204, %p205
      %p207 = scmp.ne.s32.totalorder %s193, %s194
      %p208 = scmp.eq.s32.totalorder %s24, 3
      %p209 = por %p207, %p208
      %p211 = scmp.ne.s32.totalorder %s194, %s210
      %p212 = scmp.eq.s32.totalorder %s24, 0
      %p213 = por %p211, %p212
      %s214 = ssub.s32 %s18, %s25
      %p215 = scmp.eq.s32.totalorder %s214, 0
      %s217 = sadd.s32 %s216, 1
      %s218 = scalar_select %p215, %s216, %s217
      %p221 = pneg %p215
      %p222 = scmp.eq.s32.totalorder %s18, 3
      %p223 = por %p221, %p222
      %p224 = scmp.ne.s32.totalorder %s216, %s219
      %p225 = scmp.eq.s32.totalorder %s18, 0
      %p226 = por %p224, %p225
      %p227 = scmp.ne.s32.totalorder %s216, %s219
      %p228 = scmp.eq.s32.totalorder %s23, 3
      %p229 = por %p227, %p228
      %p230 = scmp.ne.s32.totalorder %s219, %s220
      %p231 = scmp.eq.s32.totalorder %s23, 0
      %p232 = por %p230, %p231
      %p233 = scmp.ne.s32.totalorder %s219, %s220
      %p234 = scmp.eq.s32.totalorder %s24, 3
      %p235 = por %p233, %p234
      %p237 = scmp.ne.s32.totalorder %s220, %s236
      %p238 = scmp.eq.s32.totalorder %s24, 0
      %p239 = por %p237, %p238
      %p240 = scmp.le.s32.totalorder 1, %s18
      %p241 = scmp.lt.s32.totalorder %s18, 5
      %p242 = pnand %p240, %p241
      %p243 = pneg %p242
      // Predicated region
      $region9: #{tpu_custom_call.1} parent=5 // pred_check
        _
      $region10: #{tpu_custom_call.1} parent=5 // pred_check_branch
        %245 = sbr.rel (%p242) target = $region12
      $region11: #{tpu_custom_call.1} parent=5 // pred_region
        %s246 = ssub.s32 %s18, 1
        // Predicated region
        $region13: #{tpu_custom_call.1} parent=11 // pred_check
          %p247 = pneg %p117
        $region14: #{tpu_custom_call.1} parent=11 // pred_check_branch
          %249 = sbr.rel (%p247) target = $region16
        $region15: #{tpu_custom_call.1} parent=11 // pred_region
          _
        $region16: #{tpu_custom_call.1} parent=11 // pred_fallthru
          _
        // Predicated region
        $region17: #{tpu_custom_call.1} parent=11 // pred_check
          %p250 = pneg %p138
        $region18: #{tpu_custom_call.1} parent=11 // pred_check_branch
          %252 = sbr.rel (%p250) target = $region20
        $region19: #{tpu_custom_call.1} parent=11 // pred_region
          _
        $region20: #{tpu_custom_call.1} parent=11 // pred_fallthru
          _
        // Predicated region
        $region21: #{tpu_custom_call.1} parent=11 // pred_check
          %p253 = pneg %p159
        $region22: #{tpu_custom_call.1} parent=11 // pred_check_branch
          %255 = sbr.rel (%p253) target = $region24
        $region23: #{tpu_custom_call.1} parent=11 // pred_region
          _
        $region24: #{tpu_custom_call.1} parent=11 // pred_fallthru
          _
        // Predicated region
        $region25: #{tpu_custom_call.1} parent=11 // pred_check
          %p256 = pneg %p180
        $region26: #{tpu_custom_call.1} parent=11 // pred_check_branch
          %258 = sbr.rel (%p256) target = $region28
        $region27: #{tpu_custom_call.1} parent=11 // pred_region
          _
        $region28: #{tpu_custom_call.1} parent=11 // pred_fallthru
          _
      $region12: #{tpu_custom_call.1} parent=5 // pred_fallthru
        _
      %p259 = scmp.lt.s32.totalorder %s18, 4
      // Predicated region
      $region29: #{tpu_custom_call.1} parent=5 // pred_check
        %p260 = pneg %p259
      $region30: #{tpu_custom_call.1} parent=5 // pred_check_branch
        %262 = sbr.rel (%p260) target = $region32
      $region31: #{tpu_custom_call.1} parent=5 // pred_region
        // Predicated region
        $region33: #{tpu_custom_call.1} parent=31 // pred_check
          %p263 = pneg %p38
        $region34: #{tpu_custom_call.1} parent=31 // pred_check_branch
          %265 = sbr.rel (%p263) target = $region36
        $region35: #{tpu_custom_call.1} parent=31 // pred_region
          %p266 = scmp.lt.s32.totalorder %s18, 3
          %s267 = scalar_select %p266, %s18, 3
          %s268 = smul.addr %s267, 8
          %s269 = smul.addr %s268, 8
          %s270 = scalar_lea.vmem %s0, %s269
        $region36: #{tpu_custom_call.1} parent=31 // pred_fallthru
          _
        // Predicated region
        $region37: #{tpu_custom_call.1} parent=31 // pred_check
          %p271 = pneg %p64
        $region38: #{tpu_custom_call.1} parent=31 // pred_check_branch
          %273 = sbr.rel (%p271) target = $region40
        $region39: #{tpu_custom_call.1} parent=31 // pred_region
          %p274 = scmp.lt.s32.totalorder %s18, 3
          %s275 = scalar_select %p274, %s18, 3
          %s276 = smul.addr %s275, 8
          %s277 = smul.addr %s276, 8
          %s278 = scalar_lea.vmem %s1, %s277
        $region40: #{tpu_custom_call.1} parent=31 // pred_fallthru
          _
        // Predicated region
        $region41: #{tpu_custom_call.1} parent=31 // pred_check
          %p279 = pneg %p90
        $region42: #{tpu_custom_call.1} parent=31 // pred_check_branch
          %281 = sbr.rel (%p279) target = $region44
        $region43: #{tpu_custom_call.1} parent=31 // pred_region
          %p282 = scmp.lt.s32.totalorder %s18, 3
          %s283 = scalar_select %p282, %s18, 3
          %s284 = smul.addr %s283, 8
          %s285 = smul.addr %s284, 8
          %s286 = scalar_lea.vmem %s2, %s285
        $region44: #{tpu_custom_call.1} parent=31 // pred_fallthru
          _
      $region32: #{tpu_custom_call.1} parent=5 // pred_fallthru
        _
      %p287 = scmp.le.s32.totalorder 1, %s18
      %p288 = scmp.lt.s32.totalorder %s18, 5
      %p289 = pnand %p287, %p288
      %p290 = pneg %p289
      // Predicated region
      $region45: #{tpu_custom_call.1} parent=5 // pred_check
        _
      $region46: #{tpu_custom_call.1} parent=5 // pred_check_branch
        %292 = sbr.rel (%p289) target = $region48
      $region47: #{tpu_custom_call.1} parent=5 // pred_region
        %s293 = ssub.s32 %s18, 1
        %p294 = scmp.lt.s32.totalorder %s23, 3
        %s295 = scalar_select %p294, %s23, 3
        %s296 = smul.addr %s295, 8
        %s297 = smul.addr %s296, 8
        %s298 = scalar_lea.vmem %s0, %s297
        %p299 = pneg %p44
        %p300 = pneg %p41
        %p301 = scmp.lt.s32.totalorder %s23, 3
        %s302 = scalar_select %p301, %s23, 3
        %s303 = smul.addr %s302, 8
        %s304 = smul.addr %s303, 8
        %s305 = scalar_lea.vmem %s1, %s304
        %p306 = pneg %p70
        %p307 = pneg %p67
        %p308 = scmp.lt.s32.totalorder %s23, 3
        %s309 = scalar_select %p308, %s23, 3
        %s310 = smul.addr %s309, 8
        %s311 = smul.addr %s310, 8
        %s312 = scalar_lea.vmem %s2, %s311
        %p313 = pneg %p96
        %p314 = pneg %p93
        %p315 = pneg %p117
        %p316 = pneg %p114
        %p317 = pneg %p138
        %p318 = pneg %p135
        %p319 = pneg %p159
        %p320 = pneg %p156
        %p321 = pneg %p180
        %p322 = pneg %p177
        %p323 = pneg %p206
        %p324 = pneg %p203
        %s325 = sand.u32 %s193, 1
        %s326 = scalar_lea.sflag [#allocation3], %s325
        %s327 = sand.u32 %s193, 1
        %s328 = scalar_lea.vmem [#allocation2], %s327
        %p329 = pneg %p232
        %p330 = pneg %p229
        %p331 = scmp.lt.s32.totalorder %s23, 3
        %s332 = scalar_select %p331, %s23, 3
        %s333 = smul.addr %s332, 8
        %s334 = smul.addr %s333, 8
        %s335 = scalar_lea.vmem %s8, %s334
        %p336 = scmp.lt.s32.totalorder %s23, 3
        %s337 = scalar_select %p336, %s23, 3
        %s338 = smul.addr %s337, 8
        %s339 = smul.addr %s338, 8
        %s340 = scalar_lea.vmem %s0, %s339
        %p341 = scmp.lt.s32.totalorder %s23, 3
        %s342 = scalar_select %p341, %s23, 3
        %s343 = smul.addr %s342, 8
        %s344 = smul.addr %s343, 8
        %s345 = scalar_lea.vmem %s1, %s344
        %p346 = scmp.lt.s32.totalorder %s23, 3
        %s347 = scalar_select %p346, %s23, 3
        %s348 = smul.addr %s347, 8
        %s349 = smul.addr %s348, 8
        %s350 = scalar_lea.vmem %s2, %s349
        %p351 = scmp.lt.s32.totalorder %s23, 3
        %s352 = scalar_select %p351, %s23, 3
        %s353 = smul.addr %s352, 8
        %s354 = smul.addr %s353, 8
        %s355 = scalar_lea.vmem %s8, %s354
        %v356 = vld [vmem:[%s340] sm:$0xff]
        %v357 = vld [vmem:[%s340 + $0x8] sm:$0xff]
        %v358 = vld [vmem:[%s340 + $0x10] sm:$0xff]
        %v359 = vld [vmem:[%s340 + $0x18] sm:$0xff]
        %v360 = vld [vmem:[%s340 + $0x20] sm:$0xff]
        %v361 = vld [vmem:[%s340 + $0x28] sm:$0xff]
        %v362 = vld [vmem:[%s340 + $0x30] sm:$0xff]
        %v363 = vld [vmem:[%s340 + $0x38] sm:$0xff]
        %v364 = vld [vmem:[%s345] sm:$0xff]
        %v365 = vld [vmem:[%s345 + $0x8] sm:$0xff]
        %v366 = vld [vmem:[%s345 + $0x10] sm:$0xff]
        %v367 = vld [vmem:[%s345 + $0x18] sm:$0xff]
        %v368 = vld [vmem:[%s345 + $0x20] sm:$0xff]
        %v369 = vld [vmem:[%s345 + $0x28] sm:$0xff]
        %v370 = vld [vmem:[%s345 + $0x30] sm:$0xff]
        %v371 = vld [vmem:[%s345 + $0x38] sm:$0xff]
        %v372 = vld [vmem:[%s350] sm:$0xff]
        %v373 = vld [vmem:[%s350 + $0x8] sm:$0xff]
        %v374 = vld [vmem:[%s350 + $0x10] sm:$0xff]
        %v375 = vld [vmem:[%s350 + $0x18] sm:$0xff]
        %v376 = vld [vmem:[%s350 + $0x20] sm:$0xff]
        %v377 = vld [vmem:[%s350 + $0x28] sm:$0xff]
        %v378 = vld [vmem:[%s350 + $0x30] sm:$0xff]
        %v379 = vld [vmem:[%s350 + $0x38] sm:$0xff]
        %v380 = vlaneseq
        %v381 = vand.u32 %v380, 127
        %382 = vset.pattern.permute.xlu0 0
        %383 = vperm.xlu0 %382, %v356
        %v384 = vpop.permute.xlu0 %383
        %385 = vset.pattern.permute.xlu0 0
        %386 = vperm.xlu0 %385, %v357
        %v387 = vpop.permute.xlu0 %386
        %388 = vset.pattern.permute.xlu0 0
        %389 = vperm.xlu0 %388, %v358
        %v390 = vpop.permute.xlu0 %389
        %391 = vset.pattern.permute.xlu0 0
        %392 = vperm.xlu0 %391, %v359
        %v393 = vpop.permute.xlu0 %392
        %394 = vset.pattern.permute.xlu0 0
        %395 = vperm.xlu0 %394, %v360
        %v396 = vpop.permute.xlu0 %395
        %397 = vset.pattern.permute.xlu0 0
        %398 = vperm.xlu0 %397, %v361
        %v399 = vpop.permute.xlu0 %398
        %400 = vset.pattern.permute.xlu0 0
        %401 = vperm.xlu0 %400, %v362
        %v402 = vpop.permute.xlu0 %401
        %403 = vset.pattern.permute.xlu0 0
        %404 = vperm.xlu0 %403, %v363
        %v405 = vpop.permute.xlu0 %404
        %vm406 = vcmp.eq.s32.totalorder %v381, %v384
        %vm407 = vcmp.eq.s32.totalorder %v381, %v387
        %vm408 = vcmp.eq.s32.totalorder %v381, %v390
        %vm409 = vcmp.eq.s32.totalorder %v381, %v393
        %vm410 = vcmp.eq.s32.totalorder %v381, %v396
        %vm411 = vcmp.eq.s32.totalorder %v381, %v399
        %vm412 = vcmp.eq.s32.totalorder %v381, %v402
        %vm413 = vcmp.eq.s32.totalorder %v381, %v405
        %v414 = vsel %vm406, 1, 0
        %v415 = vsel %vm407, 1, 0
        %v416 = vsel %vm408, 1, 0
        %v417 = vsel %vm409, 1, 0
        %v418 = vsel %vm410, 1, 0
        %v419 = vsel %vm411, 1, 0
        %v420 = vsel %vm412, 1, 0
        %v421 = vsel %vm413, 1, 0
        %v422 = vcvt.s32.f32 %v414
        %v423 = vcvt.s32.f32 %v415
        %v424 = vcvt.s32.f32 %v416
        %v425 = vcvt.s32.f32 %v417
        %v426 = vcvt.s32.f32 %v418
        %v427 = vcvt.s32.f32 %v419
        %v428 = vcvt.s32.f32 %v420
        %v429 = vcvt.s32.f32 %v421
        %430 = vset.pattern.permute.xlu0 0
        %431 = vperm.xlu0 %430, %v364
        %v432 = vpop.permute.xlu0 %431
        %433 = vset.pattern.permute.xlu0 0
        %434 = vperm.xlu0 %433, %v365
        %v435 = vpop.permute.xlu0 %434
        %436 = vset.pattern.permute.xlu0 0
        %437 = vperm.xlu0 %436, %v366
        %v438 = vpop.permute.xlu0 %437
        %439 = vset.pattern.permute.xlu0 0
        %440 = vperm.xlu0 %439, %v367
        %v441 = vpop.permute.xlu0 %440
        %442 = vset.pattern.permute.xlu0 0
        %443 = vperm.xlu0 %442, %v368
        %v444 = vpop.permute.xlu0 %443
        %445 = vset.pattern.permute.xlu0 0
        %446 = vperm.xlu0 %445, %v369
        %v447 = vpop.permute.xlu0 %446
        %448 = vset.pattern.permute.xlu0 0
        %449 = vperm.xlu0 %448, %v370
        %v450 = vpop.permute.xlu0 %449
        %451 = vset.pattern.permute.xlu0 0
        %452 = vperm.xlu0 %451, %v371
        %v453 = vpop.permute.xlu0 %452
        %vm454 = vcmp.eq.s32.totalorder %v381, %v432
        %vm455 = vcmp.eq.s32.totalorder %v381, %v435
        %vm456 = vcmp.eq.s32.totalorder %v381, %v438
        %vm457 = vcmp.eq.s32.totalorder %v381, %v441
        %vm458 = vcmp.eq.s32.totalorder %v381, %v444
        %vm459 = vcmp.eq.s32.totalorder %v381, %v447
        %vm460 = vcmp.eq.s32.totalorder %v381, %v450
        %vm461 = vcmp.eq.s32.totalorder %v381, %v453
        %v462 = vsel %vm454, 1, 0
        %v463 = vsel %vm455, 1, 0
        %v464 = vsel %vm456, 1, 0
        %v465 = vsel %vm457, 1, 0
        %v466 = vsel %vm458, 1, 0
        %v467 = vsel %vm459, 1, 0
        %v468 = vsel %vm460, 1, 0
        %v469 = vsel %vm461, 1, 0
        %v470 = vcvt.s32.f32 %v462
        %v471 = vcvt.s32.f32 %v463
        %v472 = vcvt.s32.f32 %v464
        %v473 = vcvt.s32.f32 %v465
        %v474 = vcvt.s32.f32 %v466
        %v475 = vcvt.s32.f32 %v467
        %v476 = vcvt.s32.f32 %v468
        %v477 = vcvt.s32.f32 %v469
        %v478 = vld [vmem:[%s3] sm:$0xff]
        %v479 = vld [vmem:[%s3 + $0x8] sm:$0xff]
        %v480 = vld [vmem:[%s5] sm:$0x1]
        %v482 = vperm.slane %v480, 0
        %vm484 = vcmask 130048
        %v486 = vsel %vm484, %v422, 0
        %v489 = vsel %vm484, %v423, 0
        %v492 = vsel %vm484, %v424, 0
        %v495 = vsel %vm484, %v425, 0
        %v498 = vsel %vm484, %v426, 0
        %v501 = vsel %vm484, %v427, 0
        %v504 = vsel %vm484, %v428, 0
        %v507 = vsel %vm484, %v429, 0
        %509 = vmatpush.msra.mxu0 0.0
        %510 = vmatpush.msra.mxu0 0.0
        %511 = vmatpush.msra.mxu0 0.0
        %512 = vmatpush.msra.mxu0 0.0
        %513 = vmatpush.msra.mxu0 0.0
        %514 = vmatpush.msra.mxu0 0.0
        %515 = vmatpush.msra.mxu0 0.0
        %516 = vmatpush.msra.mxu0 0.0
        %517 = vmatpush.msra.mxu0 0.0
        %518 = vmatpush.msra.mxu0 0.0
        %519 = vmatpush.msra.mxu0 0.0
        %520 = vmatpush.msra.mxu0 0.0
        %521 = vmatpush.msra.mxu0 0.0
        %522 = vmatpush.msra.mxu0 0.0
        %523 = vmatpush.msra.mxu0 %v479
        %524 = vmatpush.msra.mxu0 %v478
        %525 = vmatmul.f32.gmra.mxu0 %v486
        %v526 = vpop.f32.mrf.mxu0
        %v527 = vadd.f32 %v482, %v526
        %528 = vmatmul.f32.gmra.mxu0 %v489
        %v529 = vpop.f32.mrf.mxu0
        %v530 = vadd.f32 %v482, %v529
        %531 = vmatmul.f32.gmra.mxu0 %v492
        %v532 = vpop.f32.mrf.mxu0
        %v533 = vadd.f32 %v482, %v532
        %534 = vmatmul.f32.gmra.mxu0 %v495
        %v535 = vpop.f32.mrf.mxu0
        %v536 = vadd.f32 %v482, %v535
        %537 = vmatmul.f32.gmra.mxu0 %v498
        %v538 = vpop.f32.mrf.mxu0
        %v539 = vadd.f32 %v482, %v538
        %540 = vmatmul.f32.gmra.mxu0 %v501
        %v541 = vpop.f32.mrf.mxu0
        %v542 = vadd.f32 %v482, %v541
        %543 = vmatmul.f32.gmra.mxu0 %v504
        %v544 = vpop.f32.mrf.mxu0
        %v545 = vadd.f32 %v482, %v544
        %546 = vmatmul.f32.gmra.mxu0 %v507
        %v547 = vpop.f32.mrf.mxu0
        %v548 = vadd.f32 %v482, %v547
        %549 = vdwg.mxu0
        %v550 = vmax.f32 %v527, 0.0
        %v551 = vmax.f32 %v530, 0.0
        %v552 = vmax.f32 %v533, 0.0
        %v553 = vmax.f32 %v536, 0.0
        %v554 = vmax.f32 %v539, 0.0
        %v555 = vmax.f32 %v542, 0.0
        %v556 = vmax.f32 %v545, 0.0
        %v557 = vmax.f32 %v548, 0.0
        %vm558 = vcmask 261120
        %559 = vst.msk [vmem:[%s355] sm:$0xff] %vm558, %v550
        %560 = vst.msk [vmem:[%s355 + $0x8] sm:$0xff] %vm558, %v551
        %561 = vst.msk [vmem:[%s355 + $0x10] sm:$0xff] %vm558, %v552
        %562 = vst.msk [vmem:[%s355 + $0x18] sm:$0xff] %vm558, %v553
        %563 = vst.msk [vmem:[%s355 + $0x20] sm:$0xff] %vm558, %v554
        %564 = vst.msk [vmem:[%s355 + $0x28] sm:$0xff] %vm558, %v555
        %565 = vst.msk [vmem:[%s355 + $0x30] sm:$0xff] %vm558, %v556
        %566 = vst.msk [vmem:[%s355 + $0x38] sm:$0xff] %vm558, %v557
        %v567 = vld [vmem:[%s4] sm:$0xff]
        %v568 = vld [vmem:[%s4 + $0x8] sm:$0xff]
        %v570 = vsel %vm558, %v550, 0
        %v573 = vsel %vm558, %v551, 0
        %v576 = vsel %vm558, %v552, 0
        %v579 = vsel %vm558, %v553, 0
        %v582 = vsel %vm558, %v554, 0
        %v585 = vsel %vm558, %v555, 0
        %v588 = vsel %vm558, %v556, 0
        %v591 = vsel %vm558, %v557, 0
        %v594 = vsel %vm558, %v567, 0
        %v597 = vsel %vm558, %v568, 0
        %599 = vmatpush.xpose.msra.mxu0 0.0
        %600 = vmatpush.xpose.msra.mxu0 0.0
        %601 = vmatpush.xpose.msra.mxu0 0.0
        %602 = vmatpush.xpose.msra.mxu0 0.0
        %603 = vmatpush.xpose.msra.mxu0 0.0
        %604 = vmatpush.xpose.msra.mxu0 0.0
        %605 = vmatpush.xpose.msra.mxu0 0.0
        %606 = vmatpush.xpose.msra.mxu0 0.0
        %607 = vmatpush.xpose.msra.mxu0 0.0
        %608 = vmatpush.xpose.msra.mxu0 0.0
        %609 = vmatpush.xpose.msra.mxu0 0.0
        %610 = vmatpush.xpose.msra.mxu0 0.0
        %611 = vmatpush.xpose.msra.mxu0 0.0
        %612 = vmatpush.xpose.msra.mxu0 0.0
        %613 = vmatpush.xpose.msra.mxu0 %v597
        %614 = vmatpush.xpose.msra.mxu0 %v594
        %615 = vmatmul.f32.gmra.mxu0 %v570
        %v616 = vpop.f32.mrf.mxu0
        %v617 = vadd.f32 0.0, %v616
        %618 = vmatmul.f32.gmra.mxu0 %v573
        %v619 = vpop.f32.mrf.mxu0
        %v620 = vadd.f32 0.0, %v619
        %621 = vmatmul.f32.gmra.mxu0 %v576
        %v622 = vpop.f32.mrf.mxu0
        %v623 = vadd.f32 0.0, %v622
        %624 = vmatmul.f32.gmra.mxu0 %v579
        %v625 = vpop.f32.mrf.mxu0
        %v626 = vadd.f32 0.0, %v625
        %627 = vmatmul.f32.gmra.mxu0 %v582
        %v628 = vpop.f32.mrf.mxu0
        %v629 = vadd.f32 0.0, %v628
        %630 = vmatmul.f32.gmra.mxu0 %v585
        %v631 = vpop.f32.mrf.mxu0
        %v632 = vadd.f32 0.0, %v631
        %633 = vmatmul.f32.gmra.mxu0 %v588
        %v634 = vpop.f32.mrf.mxu0
        %v635 = vadd.f32 0.0, %v634
        %636 = vmatmul.f32.gmra.mxu0 %v591
        %v637 = vpop.f32.mrf.mxu0
        %v638 = vadd.f32 0.0, %v637
        %639 = vdwg.mxu0
        %v640 = vsel %vm484, %v617, -inf
        %641 = vmax.xlane.f32.xlu0 %v640
        %v642 = vpop.xlane.xlu0 %641
        %v643 = vsel %vm484, %v620, -inf
        %644 = vmax.xlane.f32.xlu0 %v643
        %v645 = vpop.xlane.xlu0 %644
        %v646 = vsel %vm484, %v623, -inf
        %647 = vmax.xlane.f32.xlu0 %v646
        %v648 = vpop.xlane.xlu0 %647
        %v649 = vsel %vm484, %v626, -inf
        %650 = vmax.xlane.f32.xlu0 %v649
        %v651 = vpop.xlane.xlu0 %650
        %v652 = vsel %vm484, %v629, -inf
        %653 = vmax.xlane.f32.xlu0 %v652
        %v654 = vpop.xlane.xlu0 %653
        %v655 = vsel %vm484, %v632, -inf
        %656 = vmax.xlane.f32.xlu0 %v655
        %v657 = vpop.xlane.xlu0 %656
        %v658 = vsel %vm484, %v635, -inf
        %659 = vmax.xlane.f32.xlu0 %v658
        %v660 = vpop.xlane.xlu0 %659
        %v661 = vsel %vm484, %v638, -inf
        %662 = vmax.xlane.f32.xlu0 %v661
        %v663 = vpop.xlane.xlu0 %662
        %v664 = vsub.f32 %v617, %v642
        %v665 = vsub.f32 %v620, %v645
        %v666 = vsub.f32 %v623, %v648
        %v667 = vsub.f32 %v626, %v651
        %v668 = vsub.f32 %v629, %v654
        %v669 = vsub.f32 %v632, %v657
        %v670 = vsub.f32 %v635, %v660
        %v671 = vsub.f32 %v638, %v663
        %v672 = vmul.f32 %v664, 1.442695
        %v673 = vpow.pop %v672
        %v674 = vmul.f32 %v665, 1.442695
        %v675 = vpow.pop %v674
        %v676 = vmul.f32 %v666, 1.442695
        %v677 = vpow.pop %v676
        %v678 = vmul.f32 %v667, 1.442695
        %v679 = vpow.pop %v678
        %v680 = vmul.f32 %v668, 1.442695
        %v681 = vpow.pop %v680
        %v682 = vmul.f32 %v669, 1.442695
        %v683 = vpow.pop %v682
        %v684 = vmul.f32 %v670, 1.442695
        %v685 = vpow.pop %v684
        %v686 = vmul.f32 %v671, 1.442695
        %v687 = vpow.pop %v686
        %v688 = vsel %vm484, %v673, 0.0
        %689 = vadd.xlane.f32.xlu0 %v688
        %v690 = vpop.xlane.xlu0 %689
        %v691 = vsel %vm484, %v675, 0.0
        %692 = vadd.xlane.f32.xlu0 %v691
        %v693 = vpop.xlane.xlu0 %692
        %v694 = vsel %vm484, %v677, 0.0
        %695 = vadd.xlane.f32.xlu0 %v694
        %v696 = vpop.xlane.xlu0 %695
        %v697 = vsel %vm484, %v679, 0.0
        %698 = vadd.xlane.f32.xlu0 %v697
        %v699 = vpop.xlane.xlu0 %698
        %v700 = vsel %vm484, %v681, 0.0
        %701 = vadd.xlane.f32.xlu0 %v700
        %v702 = vpop.xlane.xlu0 %701
        %v703 = vsel %vm484, %v683, 0.0
        %704 = vadd.xlane.f32.xlu0 %v703
        %v705 = vpop.xlane.xlu0 %704
        %v706 = vsel %vm484, %v685, 0.0
        %707 = vadd.xlane.f32.xlu0 %v706
        %v708 = vpop.xlane.xlu0 %707
        %v709 = vsel %vm484, %v687, 0.0
        %710 = vadd.xlane.f32.xlu0 %v709
        %v711 = vpop.xlane.xlu0 %710
        %v712 = vlog2.pop %v690
        %v713 = vmul.f32 %v712, 0.6931472
        %v714 = vlog2.pop %v693
        %v715 = vmul.f32 %v714, 0.6931472
        %v716 = vlog2.pop %v696
        %v717 = vmul.f32 %v716, 0.6931472
        %v718 = vlog2.pop %v699
        %v719 = vmul.f32 %v718, 0.6931472
        %v720 = vlog2.pop %v702
        %v721 = vmul.f32 %v720, 0.6931472
        %v722 = vlog2.pop %v705
        %v723 = vmul.f32 %v722, 0.6931472
        %v724 = vlog2.pop %v708
        %v725 = vmul.f32 %v724, 0.6931472
        %v726 = vlog2.pop %v711
        %v727 = vmul.f32 %v726, 0.6931472
        %v728 = vadd.f32 %v713, %v642
        %v729 = vadd.f32 %v715, %v645
        %v730 = vadd.f32 %v717, %v648
        %v731 = vadd.f32 %v719, %v651
        %v732 = vadd.f32 %v721, %v654
        %v733 = vadd.f32 %v723, %v657
        %v734 = vadd.f32 %v725, %v660
        %v735 = vadd.f32 %v727, %v663
        %v736 = vmul.f32 %v470, %v617
        %v737 = vmul.f32 %v471, %v620
        %v738 = vmul.f32 %v472, %v623
        %v739 = vmul.f32 %v473, %v626
        %v740 = vmul.f32 %v474, %v629
        %v741 = vmul.f32 %v475, %v632
        %v742 = vmul.f32 %v476, %v635
        %v743 = vmul.f32 %v477, %v638
        %v744 = vsel %vm484, %v736, 0.0
        %745 = vadd.xlane.f32.xlu0 %v744
        %v746 = vpop.xlane.xlu0 %745
        %v747 = vsel %vm484, %v737, 0.0
        %748 = vadd.xlane.f32.xlu0 %v747
        %v749 = vpop.xlane.xlu0 %748
        %v750 = vsel %vm484, %v738, 0.0
        %751 = vadd.xlane.f32.xlu0 %v750
        %v752 = vpop.xlane.xlu0 %751
        %v753 = vsel %vm484, %v739, 0.0
        %754 = vadd.xlane.f32.xlu0 %v753
        %v755 = vpop.xlane.xlu0 %754
        %v756 = vsel %vm484, %v740, 0.0
        %757 = vadd.xlane.f32.xlu0 %v756
        %v758 = vpop.xlane.xlu0 %757
        %v759 = vsel %vm484, %v741, 0.0
        %760 = vadd.xlane.f32.xlu0 %v759
        %v761 = vpop.xlane.xlu0 %760
        %v762 = vsel %vm484, %v742, 0.0
        %763 = vadd.xlane.f32.xlu0 %v762
        %v764 = vpop.xlane.xlu0 %763
        %v765 = vsel %vm484, %v743, 0.0
        %766 = vadd.xlane.f32.xlu0 %v765
        %v767 = vpop.xlane.xlu0 %766
        %v768 = vsub.f32 %v728, %v746
        %v769 = vsub.f32 %v729, %v749
        %v770 = vsub.f32 %v730, %v752
        %v771 = vsub.f32 %v731, %v755
        %v772 = vsub.f32 %v732, %v758
        %v773 = vsub.f32 %v733, %v761
        %v774 = vsub.f32 %v734, %v764
        %v775 = vsub.f32 %v735, %v767
        %vm776 = vcmask 7168
        %v777 = vsel %vm776, %v372, 0.0
        %v778 = vsel %vm776, %v373, 0.0
        %v779 = vadd.f32 %v777, %v778
        %v780 = vsel %vm776, %v374, 0.0
        %v781 = vadd.f32 %v779, %v780
        %v782 = vsel %vm776, %v375, 0.0
        %v783 = vadd.f32 %v781, %v782
        %v784 = vsel %vm776, %v376, 0.0
        %v785 = vadd.f32 %v783, %v784
        %v786 = vsel %vm776, %v377, 0.0
        %v787 = vadd.f32 %v785, %v786
        %v788 = vsel %vm776, %v378, 0.0
        %v789 = vadd.f32 %v787, %v788
        %v790 = vsel %vm776, %v379, 0.0
        %v791 = vadd.f32 %v789, %v790
        %792 = vadd.xlane.f32.xlu0 %v791
        %v793 = vpop.xlane.xlu0 %792
        %v794 = vrot.slane %v793, 4
        %v795 = vadd.f32 %v793, %v794
        %v796 = vrot.slane %v795, 2
        %v797 = vadd.f32 %v795, %v796
        %v798 = vrot.slane %v797, 1
        %v799 = vadd.f32 %v797, %v798
        %s800 = vtos %v799
        %s801 = smax.f32 %s800, 1.0
        %v802 = vstv %s801
        %v803 = vrcp.pop %v802
        %v804 = vmul.f32 %v802, %v803
        %v805 = vsub.f32 1.0, %v804
        %v806 = vmul.f32 %v803, %v805
        %v807 = vadd.f32 %v803, %v806
        %vm808 = vweird.f32 %v802
        %vm809 = vweird.f32 %v803
        %vm810 = vmor %vm808, %vm809
        %v811 = vsel %vm810, %v803, %v807
        %v812 = vand.u32 2147483647, %v802
        %vm813 = vcmp.eq.f32.partialorder %v812, 8.507059e+37
        %v814 = vand.u32 %v802, 2147483648
        %v815 = vor.u32 1.1754944e-38, %v814
        %v816 = vsel %vm813, %v815, %v811
        %s817 = vtos %v816
        %v818 = vmul.f32 %v768, %v372
        %v819 = vmul.f32 %v769, %v373
        %v820 = vmul.f32 %v770, %v374
        %v821 = vmul.f32 %v771, %v375
        %v822 = vmul.f32 %v772, %v376
        %v823 = vmul.f32 %v773, %v377
        %v824 = vmul.f32 %v774, %v378
        %v825 = vmul.f32 %v775, %v379
        %v826 = vsel %vm776, %v818, 0.0
        %v827 = vsel %vm776, %v819, 0.0
        %v828 = vadd.f32 %v826, %v827
        %v829 = vsel %vm776, %v820, 0.0
        %v830 = vadd.f32 %v828, %v829
        %v831 = vsel %vm776, %v821, 0.0
        %v832 = vadd.f32 %v830, %v831
        %v833 = vsel %vm776, %v822, 0.0
        %v834 = vadd.f32 %v832, %v833
        %v835 = vsel %vm776, %v823, 0.0
        %v836 = vadd.f32 %v834, %v835
        %v837 = vsel %vm776, %v824, 0.0
        %v838 = vadd.f32 %v836, %v837
        %v839 = vsel %vm776, %v825, 0.0
        %v840 = vadd.f32 %v838, %v839
        %841 = vadd.xlane.f32.xlu0 %v840
        %v842 = vpop.xlane.xlu0 %841
        %v843 = vrot.slane %v842, 4
        %v844 = vadd.f32 %v842, %v843
        %v845 = vrot.slane %v844, 2
        %v846 = vadd.f32 %v844, %v845
        %v847 = vrot.slane %v846, 1
        %v848 = vadd.f32 %v846, %v847
        %s849 = vtos %v848
        %s850 = smul.f32 %s849, %s817
        %vm851 = vcmp.ge.f32.partialorder %v617, %v642
        %vm852 = vcmp.ge.f32.partialorder %v620, %v645
        %vm853 = vcmp.ge.f32.partialorder %v623, %v648
        %vm854 = vcmp.ge.f32.partialorder %v626, %v651
        %vm855 = vcmp.ge.f32.partialorder %v629, %v654
        %vm856 = vcmp.ge.f32.partialorder %v632, %v657
        %vm857 = vcmp.ge.f32.partialorder %v635, %v660
        %vm858 = vcmp.ge.f32.partialorder %v638, %v663
        %v859 = vcvt.s32.f32 %v381
        %v860 = vsel %vm851, %v859, 16.0
        %v861 = vsel %vm852, %v859, 16.0
        %v862 = vsel %vm853, %v859, 16.0
        %v863 = vsel %vm854, %v859, 16.0
        %v864 = vsel %vm855, %v859, 16.0
        %v865 = vsel %vm856, %v859, 16.0
        %v866 = vsel %vm857, %v859, 16.0
        %v867 = vsel %vm858, %v859, 16.0
        %v868 = vsel %vm484, %v860, inf
        %869 = vmin.xlane.f32.xlu0 %v868
        %v870 = vpop.xlane.xlu0 %869
        %v871 = vsel %vm484, %v861, inf
        %872 = vmin.xlane.f32.xlu0 %v871
        %v873 = vpop.xlane.xlu0 %872
        %v874 = vsel %vm484, %v862, inf
        %875 = vmin.xlane.f32.xlu0 %v874
        %v876 = vpop.xlane.xlu0 %875
        %v877 = vsel %vm484, %v863, inf
        %878 = vmin.xlane.f32.xlu0 %v877
        %v879 = vpop.xlane.xlu0 %878
        %v880 = vsel %vm484, %v864, inf
        %881 = vmin.xlane.f32.xlu0 %v880
        %v882 = vpop.xlane.xlu0 %881
        %v883 = vsel %vm484, %v865, inf
        %884 = vmin.xlane.f32.xlu0 %v883
        %v885 = vpop.xlane.xlu0 %884
        %v886 = vsel %vm484, %v866, inf
        %887 = vmin.xlane.f32.xlu0 %v886
        %v888 = vpop.xlane.xlu0 %887
        %v889 = vsel %vm484, %v867, inf
        %890 = vmin.xlane.f32.xlu0 %v889
        %v891 = vpop.xlane.xlu0 %890
        %v892 = vcvt.s32.f32 %v364
        %v893 = vcvt.s32.f32 %v365
        %v894 = vcvt.s32.f32 %v366
        %v895 = vcvt.s32.f32 %v367
        %v896 = vcvt.s32.f32 %v368
        %v897 = vcvt.s32.f32 %v369
        %v898 = vcvt.s32.f32 %v370
        %v899 = vcvt.s32.f32 %v371
        %vm900 = vcmp.eq.f32.partialorder %v870, %v892
        %vm901 = vcmp.eq.f32.partialorder %v873, %v893
        %vm902 = vcmp.eq.f32.partialorder %v876, %v894
        %vm903 = vcmp.eq.f32.partialorder %v879, %v895
        %vm904 = vcmp.eq.f32.partialorder %v882, %v896
        %vm905 = vcmp.eq.f32.partialorder %v885, %v897
        %vm906 = vcmp.eq.f32.partialorder %v888, %v898
        %vm907 = vcmp.eq.f32.partialorder %v891, %v899
        %v908 = vsel %vm900, 1, 0
        %v909 = vsel %vm901, 1, 0
        %v910 = vsel %vm902, 1, 0
        %v911 = vsel %vm903, 1, 0
        %v912 = vsel %vm904, 1, 0
        %v913 = vsel %vm905, 1, 0
        %v914 = vsel %vm906, 1, 0
        %v915 = vsel %vm907, 1, 0
        %v916 = vcvt.s32.f32 %v908
        %v917 = vcvt.s32.f32 %v909
        %v918 = vcvt.s32.f32 %v910
        %v919 = vcvt.s32.f32 %v911
        %v920 = vcvt.s32.f32 %v912
        %v921 = vcvt.s32.f32 %v913
        %v922 = vcvt.s32.f32 %v914
        %v923 = vcvt.s32.f32 %v915
        %v924 = vmul.f32 %v916, %v372
        %v925 = vmul.f32 %v917, %v373
        %v926 = vmul.f32 %v918, %v374
        %v927 = vmul.f32 %v919, %v375
        %v928 = vmul.f32 %v920, %v376
        %v929 = vmul.f32 %v921, %v377
        %v930 = vmul.f32 %v922, %v378
        %v931 = vmul.f32 %v923, %v379
        %v932 = vsel %vm776, %v924, 0.0
        %v933 = vsel %vm776, %v925, 0.0
        %v934 = vadd.f32 %v932, %v933
        %v935 = vsel %vm776, %v926, 0.0
        %v936 = vadd.f32 %v934, %v935
        %v937 = vsel %vm776, %v927, 0.0
        %v938 = vadd.f32 %v936, %v937
        %v939 = vsel %vm776, %v928, 0.0
        %v940 = vadd.f32 %v938, %v939
        %v941 = vsel %vm776, %v929, 0.0
        %v942 = vadd.f32 %v940, %v941
        %v943 = vsel %vm776, %v930, 0.0
        %v944 = vadd.f32 %v942, %v943
        %v945 = vsel %vm776, %v931, 0.0
        %v946 = vadd.f32 %v944, %v945
        %947 = vadd.xlane.f32.xlu0 %v946
        %v948 = vpop.xlane.xlu0 %947
        %v949 = vrot.slane %v948, 4
        %v950 = vadd.f32 %v948, %v949
        %v951 = vrot.slane %v950, 2
        %v952 = vadd.f32 %v950, %v951
        %v953 = vrot.slane %v952, 1
        %v954 = vadd.f32 %v952, %v953
        %s955 = vtos %v954
        %s956 = smul.f32 %s955, %s817
        %v957 = vld [vmem:[%s6] sm:$0xff]
        %v958 = vld [vmem:[%s6 + $0x8] sm:$0xff]
        %v959 = vld [vmem:[%s6 + $0x10] sm:$0xff]
        %v960 = vld [vmem:[%s6 + $0x18] sm:$0xff]
        %961 = vmatpush.msra.mxu0 0.0
        %962 = vmatpush.msra.mxu0 0.0
        %963 = vmatpush.msra.mxu0 0.0
        %964 = vmatpush.msra.mxu0 0.0
        %965 = vmatpush.msra.mxu0 0.0
        %966 = vmatpush.msra.mxu0 0.0
        %967 = vmatpush.msra.mxu0 0.0
        %968 = vmatpush.msra.mxu0 0.0
        %969 = vmatpush.msra.mxu0 0.0
        %970 = vmatpush.msra.mxu0 0.0
        %971 = vmatpush.msra.mxu0 0.0
        %972 = vmatpush.msra.mxu0 0.0
        %973 = vmatpush.msra.mxu0 %v960
        %974 = vmatpush.msra.mxu0 %v959
        %975 = vmatpush.msra.mxu0 %v958
        %976 = vmatpush.msra.mxu0 %v957
        %977 = vmatmul.f32.gmra.mxu0 %v570
        %v978 = vpop.f32.mrf.mxu0
        %v979 = vadd.f32 0.0, %v978
        %980 = vmatmul.f32.gmra.mxu0 %v573
        %v981 = vpop.f32.mrf.mxu0
        %v982 = vadd.f32 0.0, %v981
        %983 = vmatmul.f32.gmra.mxu0 %v576
        %v984 = vpop.f32.mrf.mxu0
        %v985 = vadd.f32 0.0, %v984
        %986 = vmatmul.f32.gmra.mxu0 %v579
        %v987 = vpop.f32.mrf.mxu0
        %v988 = vadd.f32 0.0, %v987
        %989 = vmatmul.f32.gmra.mxu0 %v582
        %v990 = vpop.f32.mrf.mxu0
        %v991 = vadd.f32 0.0, %v990
        %992 = vmatmul.f32.gmra.mxu0 %v585
        %v993 = vpop.f32.mrf.mxu0
        %v994 = vadd.f32 0.0, %v993
        %995 = vmatmul.f32.gmra.mxu0 %v588
        %v996 = vpop.f32.mrf.mxu0
        %v997 = vadd.f32 0.0, %v996
        %998 = vmatmul.f32.gmra.mxu0 %v591
        %v999 = vpop.f32.mrf.mxu0
        %v1000 = vadd.f32 0.0, %v999
        %1001 = vdwg.mxu0
        %v1002 = vsel %vm776, %v979, 0.0
        %v1003 = vsel %vm776, %v982, 0.0
        %v1004 = vadd.f32 %v1002, %v1003
        %v1005 = vsel %vm776, %v985, 0.0
        %v1006 = vadd.f32 %v1004, %v1005
        %v1007 = vsel %vm776, %v988, 0.0
        %v1008 = vadd.f32 %v1006, %v1007
        %v1009 = vsel %vm776, %v991, 0.0
        %v1010 = vadd.f32 %v1008, %v1009
        %v1011 = vsel %vm776, %v994, 0.0
        %v1012 = vadd.f32 %v1010, %v1011
        %v1013 = vsel %vm776, %v997, 0.0
        %v1014 = vadd.f32 %v1012, %v1013
        %v1015 = vsel %vm776, %v1000, 0.0
        %v1016 = vadd.f32 %v1014, %v1015
        %1017 = vadd.xlane.f32.xlu0 %v1016
        %v1018 = vpop.xlane.xlu0 %1017
        %v1019 = vrot.slane %v1018, 4
        %v1020 = vadd.f32 %v1018, %v1019
        %v1021 = vrot.slane %v1020, 2
        %v1022 = vadd.f32 %v1020, %v1021
        %v1023 = vrot.slane %v1022, 1
        %v1024 = vadd.f32 %v1022, %v1023
        %s1025 = vtos %v1024
        %s1026 = smul.f32 %s1025, 0.015625
        %vm1027 = vcmp.eq.s32.totalorder %v381, 0
        %vm1028 = vcmp.eq.s32.totalorder %v381, 1
        %vm1029 = vcmp.eq.s32.totalorder %v381, 2
        %v1030 = vstv %s1026
        %v1031 = vstv %s800
        %v1032 = vsel %vm1029, %v1030, %v1031
        %v1033 = vstv %s956
        %v1034 = vsel %vm1028, %v1033, %v1032
        %v1035 = vstv %s850
        %v1036 = vsel %vm1027, %v1035, %v1034
        %vm1037 = vcmask 24576
        %1038 = vst.msk [vmem:[%s328] sm:$0x1] %vm1037, %v1036
        %s1039 = sand.u32 %s193, 1
        %s1040 = scalar_lea.sflag [#allocation3], %s1039
        %s1041 = sand.u32 %s193, 1
        %s1042 = scalar_lea.vmem [#allocation2], %s1041
        %p1043 = scmp.lt.s32.totalorder %s23, 3
        %s1044 = scalar_select %p1043, %s23, 3
        %s1045 = smul.addr %s1044, 8
        %s1046 = smul.addr %s1045, 8
        %s1047 = scalar_lea.vmem %s8, %s1046
        // Predicated region
        $region49: #{tpu_custom_call.1} parent=47 // pred_check
          %p1048 = pneg %p203
        $region50: #{tpu_custom_call.1} parent=47 // pred_check_branch
          %1050 = sbr.rel (%p1048) target = $region52
        $region51: #{tpu_custom_call.1} parent=47 // pred_region
          %1052 = vsyncadd %s1040, 0
          %s1053 = scalar_lea.hbm %s7, %s23
          %s1055 = sshll.u32 %s1042, 4
          %s1056 = int_to_ptr.vmem [resolvable:$true] %s1055
          %s1057 = sshll.u32 %s1053, 4
          %s1058 = int_to_ptr.hbm [resolvable:$true] %s1057
          %1060 = dma.vmem_to_hbm [thread:$0]  %s1056, 16, %s1058, %s1040
        $region52: #{tpu_custom_call.1} parent=47 // pred_fallthru
          _
        // Predicated region
        $region53: #{tpu_custom_call.1} parent=47 // pred_check
          %p1061 = pneg %p229
        $region54: #{tpu_custom_call.1} parent=47 // pred_check_branch
          %1063 = sbr.rel (%p1061) target = $region56
        $region55: #{tpu_custom_call.1} parent=47 // pred_region
          _
        $region56: #{tpu_custom_call.1} parent=47 // pred_fallthru
          _
      $region48: #{tpu_custom_call.1} parent=5 // pred_fallthru
        _
      %p1064 = scmp.le.s32.totalorder 2, %s18
      // Predicated region
      $region57: #{tpu_custom_call.1} parent=5 // pred_check
        %p1065 = pneg %p1064
      $region58: #{tpu_custom_call.1} parent=5 // pred_check_branch
        %1067 = sbr.rel (%p1065) target = $region60
      $region59: #{tpu_custom_call.1} parent=5 // pred_region
        %s1068 = ssub.s32 %s18, 2
        // Predicated region
        $region61: #{tpu_custom_call.1} parent=59 // pred_check
          %p1069 = pneg %p209
        $region62: #{tpu_custom_call.1} parent=59 // pred_check_branch
          %1071 = sbr.rel (%p1069) target = $region64
        $region63: #{tpu_custom_call.1} parent=59 // pred_region
          %s1072 = sand.u32 %s194, 1
          %s1073 = scalar_lea.sflag [#allocation3], %s1072
          %s1074 = sand.u32 %s194, 1
          %s1075 = scalar_lea.vmem [#allocation2], %s1074
          %1077 = dma.done %s1073, 16
        $region64: #{tpu_custom_call.1} parent=59 // pred_fallthru
          _
        // Predicated region
        $region65: #{tpu_custom_call.1} parent=59 // pred_check
          %p1078 = pneg %p235
        $region66: #{tpu_custom_call.1} parent=59 // pred_check_branch
          %1080 = sbr.rel (%p1078) target = $region68
        $region67: #{tpu_custom_call.1} parent=59 // pred_region
          %p1081 = scmp.lt.s32.totalorder %s24, 3
          %s1082 = scalar_select %p1081, %s24, 3
          %s1083 = smul.addr %s1082, 8
          %s1084 = smul.addr %s1083, 8
          %s1085 = scalar_lea.vmem %s8, %s1084
        $region68: #{tpu_custom_call.1} parent=59 // pred_fallthru
          _
      $region60: #{tpu_custom_call.1} parent=5 // pred_fallthru
        _
    $region6: #{tpu_custom_call.1} parent=1 // loop_footer
      %s22 = sadd.s32 1, %s18
    $region7: #{tpu_custom_call.1} parent=1 // loop_footer_branch
      %17 = sbr.rel target = $region3
    $region8: #{tpu_custom_call.1} parent=1 // loop_exit
      _
    %1086 = vsyncpa [#allocation3], 1
    %s1087 = scalar_lea.sflag [#allocation3], 1
    %1088 = vsyncpa %s1087, 1

</llo_original>
